<compile_context>
chip_gen: v7x
topology: tpu7x:2x2x1
jax: 0.10.0
libtpu: 0.0.40
codegen_flags: <defaults>
</compile_context>

<pallas_src>
import functools
from typing import NamedTuple

import jax
import jax.numpy as jnp
from jax import lax
from jax.experimental import pallas as pl
from jax.experimental.pallas import tpu as pltpu

LN_EPS = 1e-5          # PyTorch nn.LayerNorm default
LANE = 128             # TPU lane width
SUBLANE = 8
MAX_TB = 512           # hard cap on batch tile rows


def _cdiv(a, b):
    return -(-a // b)


def _pad_to(n, m):
    return _cdiv(n, m) * m


# ---------------------------------------------------------------------------
# Runtime capability probes (evaluated lazily, once)
# ---------------------------------------------------------------------------
_SINGLE_BUFFER_CACHE = []   # [] -> unknown, [bool] -> probed


def _single_buffer_supported():
    """Whether pl.Buffered(1) on a constant-index_map input compiles & is correct."""
    if not _SINGLE_BUFFER_CACHE:
        ok = False
        try:
            def k(x_ref, o_ref):
                step = lax.convert_element_type(pl.program_id(0), jnp.float32)
                o_ref[...] = x_ref[...] + step

            x = jnp.arange(8 * 128, dtype=jnp.float32).reshape(8, 128)
            f = pl.pallas_call(
                k,
                out_shape=jax.ShapeDtypeStruct((16, 128), jnp.float32),
                grid=(2,),
                in_specs=[pl.BlockSpec((8, 128), lambda i: (0, 0),
                                       pipeline_mode=pl.Buffered(buffer_count=1))],
                out_specs=pl.BlockSpec((8, 128), lambda i: (i, 0)),
            )
            y = jax.block_until_ready(f(x))
            ok = bool(jnp.allclose(y[:8], x)) and bool(jnp.allclose(y[8:], x + 1.0))
        except Exception:
            ok = False
        _SINGLE_BUFFER_CACHE.append(ok)
    return _SINGLE_BUFFER_CACHE[0]


def _vmem_budget_bytes():
    """Usable VMEM budget per TensorCore (conservative fraction of physical)."""
    try:
        cap = int(pltpu.get_tpu_info().vmem_capacity_bytes)
    except Exception:
        cap = 64 * 1024 * 1024       # conservative: v7x per-TC VMEM
    return min((cap * 3) // 4, 100 * 1024 * 1024)


# ---------------------------------------------------------------------------
# Fused kernel factory
# ---------------------------------------------------------------------------
def _make_fused_kernel(n_hidden, hidden_logical_dims):
    """(Linear -> Tanh -> LayerNorm)^n_hidden -> Linear -> Sigmoid.

    Ref layout: (x_ref, [w,b,gamma,beta]*n_hidden, w_out, b_out, o_ref).
    Feature dims are padded to multiples of 128; padded weight rows/cols and
    padded bias/gamma/beta lanes are zero, so padded activation lanes stay zero
    through every layer (no LayerNorm lane mask needed).
    """

    def kernel(*refs):
        x_ref = refs[0]
        o_ref = refs[-1]
        p = refs[1:-1]

        h = x_ref[...].astype(jnp.float32)              # (TB, Din_pad), f32
        idx = 0
        for li in range(n_hidden):
            w = p[idx][...]                             # (Din_pad, Dout_pad), bf16
            b = p[idx + 1][...]                         # (1, Dout_pad), f32
            g = p[idx + 2][...]                         # (1, Dout_pad), f32
            beta = p[idx + 3][...]                      # (1, Dout_pad), f32
            idx += 4
            inv_d = 1.0 / float(hidden_logical_dims[li])

            # bf16 MXU operands, f32 accumulation.
            y = jnp.dot(h.astype(w.dtype), w,
                        preferred_element_type=jnp.float32) + b
            t = jnp.tanh(y)                             # padded lanes stay exactly 0

            # LayerNorm over the logical feature dim. No mask: padded lanes of t
            # are zero (drop out of the sums) and gamma/beta padding is zero, so
            # the scale/shift keeps padded output lanes at zero.
            mean = jnp.sum(t, axis=-1, keepdims=True) * inv_d
            mean_sq = jnp.sum(t * t, axis=-1, keepdims=True) * inv_d
            var = mean_sq - mean * mean                 # t bounded in [-1,1] -> safe
            h = (t - mean) * lax.rsqrt(var + LN_EPS) * g + beta
            # TODO(synk): training-mode dropout (pltpu.prng_random_bits mask);
            # eval-mode dropout is the identity, which is what we implement.

        w = p[idx][...]
        b = p[idx + 1][...]
        y = jnp.dot(h.astype(w.dtype), w, preferred_element_type=jnp.float32) + b
        o_ref[...] = jax.nn.sigmoid(y).astype(o_ref.dtype)

    return kernel


# ---------------------------------------------------------------------------
# Parameter preparation (pad ONCE, outside the jitted forward)
# ---------------------------------------------------------------------------
class _ModelMeta(NamedTuple):
    input_dim: int
    hidden_dims: tuple
    output_dim: int


class _Config(NamedTuple):
    input_dim: int
    hidden_dims: tuple
    output_dim: int
    single_buffer: bool
    vmem_budget: int


def prepare_params(params, input_dim, mxu_dtype=jnp.bfloat16):
    """Pad weights/bias/LN params to lane-dense shapes once.

    Weights -> bf16 (MXU operands); bias/gamma/beta -> f32 (elementwise path).
    Returns (flat_param_tuple, meta).
    """
    dims_out = [int(p["w"].shape[1]) for p in params]
    dims_in = [int(input_dim)] + dims_out[:-1]
    flat = []
    for li, layer in enumerate(params):
        din, dout = dims_in[li], dims_out[li]
        din_p, dout_p = _pad_to(din, LANE), _pad_to(dout, LANE)
        w = jnp.zeros((din_p, dout_p), mxu_dtype)
        w = w.at[:din, :dout].set(layer["w"].astype(mxu_dtype))
        b = jnp.zeros((1, dout_p), jnp.float32)
        b = b.at[0, :dout].set(layer["b"].astype(jnp.float32))
        flat += [w, b]
        if li < len(params) - 1:
            g = jnp.zeros((1, dout_p), jnp.float32)
            g = g.at[0, :dout].set(layer["gamma"].astype(jnp.float32))
            be = jnp.zeros((1, dout_p), jnp.float32)
            be = be.at[0, :dout].set(layer["beta"].astype(jnp.float32))
            flat += [g, be]
    meta = _ModelMeta(int(input_dim), tuple(dims_out[:-1]), dims_out[-1])
    return tuple(flat), meta


# ---------------------------------------------------------------------------
# Tiling / VMEM budgeting
# ---------------------------------------------------------------------------
def _choose_tb(B, din_pad, dout_pad, dmax_pad, resident_bytes, budget, io_itemsize):
    cap = MAX_TB
    if B >= 16:
        # >=2 grid steps so dimension_semantics=("parallel",) can use both v7x TCs.
        cap = min(cap, _pad_to(_cdiv(B, 2), SUBLANE))
    tb = min(_pad_to(B, SUBLANE), cap)

    def vmem_needed(t):
        io = 2 * t * din_pad * io_itemsize + 2 * t * dout_pad * io_itemsize  # 2x-buffered x/out tiles
        act = 4 * t * dmax_pad * 4                                           # f32 activation temporaries
        return resident_bytes + io + act

    while tb > SUBLANE and vmem_needed(tb) > budget:
        tb = max(SUBLANE, _pad_to(tb // 2, SUBLANE))
    if vmem_needed(tb) > budget:
        # TODO(synk): streaming K/N-tiled weight fallback for hidden dims whose
        # bf16 weights exceed the per-core VMEM budget (needed mainly on v7x).
        raise NotImplementedError(
            "Resident-weight fused MLP does not fit in the VMEM budget; "
            "streaming weight fallback not implemented.")
    return tb, vmem_needed(tb)


def _resident_spec(shape, single_buffer):
    ndim = len(shape)
    index_map = lambda i: (0,) * ndim          # constant -> VMEM-resident block
    if single_buffer:
        return pl.BlockSpec(shape, index_map,
                            pipeline_mode=pl.Buffered(buffer_count=1))
    return pl.BlockSpec(shape, index_map)


# ---------------------------------------------------------------------------
# Forward pass
# ---------------------------------------------------------------------------
@functools.partial(jax.jit, static_argnames=("cfg",))
def _forward_impl(x, flat, cfg):
    B, d_in = x.shape
    if d_in != cfg.input_dim:
        raise ValueError(f"expected input dim {cfg.input_dim}, got {d_in}")

    dims_out = list(cfg.hidden_dims) + [cfg.output_dim]
    dims_in = [cfg.input_dim] + dims_out[:-1]
    dims_in_pad = [_pad_to(d, LANE) for d in dims_in]
    dims_out_pad = [_pad_to(d, LANE) for d in dims_out]
    n_hidden = len(cfg.hidden_dims)
    din_pad, out_pad = dims_in_pad[0], dims_out_pad[-1]
    dmax_pad = max(dims_in_pad + dims_out_pad)

    buf_factor = 1 if cfg.single_buffer else 2
    resident_bytes = buf_factor * sum(int(a.size) * a.dtype.itemsize for a in flat)

    tb, needed = _choose_tb(B, din_pad, out_pad, dmax_pad, resident_bytes,
                            cfg.vmem_budget, x.dtype.itemsize)
    b_pad = _pad_to(B, tb)
    grid = (b_pad // tb,)

    # Pad x to a lane-dense slab only when actually required.
    if b_pad != B or din_pad != d_in:
        x_p = jnp.zeros((b_pad, din_pad), x.dtype).at[:B, :d_in].set(x)
    else:
        x_p = x

    in_specs = [pl.BlockSpec((tb, din_pad), lambda i: (i, 0))]
    in_specs += [_resident_spec(a.shape, cfg.single_buffer) for a in flat]

    kernel = _make_fused_kernel(n_hidden, cfg.hidden_dims)
    vmem_limit = int(min(cfg.vmem_budget,
                         max(32 * 1024 * 1024, needed + needed // 4)))

    out = pl.pallas_call(
        kernel,
        out_shape=jax.ShapeDtypeStruct((b_pad, out_pad), x.dtype),
        grid=grid,
        in_specs=in_specs,
        out_specs=pl.BlockSpec((tb, out_pad), lambda i: (i, 0)),
        compiler_params=pltpu.CompilerParams(
            dimension_semantics=("parallel",),   # shard batch axis across TCs (v7x)
            vmem_limit_bytes=vmem_limit,
        ),
    )(x_p, *flat)

    if b_pad != B or out_pad != cfg.output_dim:
        out = out[:B, :cfg.output_dim]
    return out


def mlp_forward(x, prepped):
    flat, meta = prepped
    cfg = _Config(meta.input_dim, meta.hidden_dims, meta.output_dim,
                  single_buffer=_single_buffer_supported(),
                  vmem_budget=_vmem_budget_bytes())
    return _forward_impl(x, flat, cfg)


# ---------------------------------------------------------------------------
# Parameter init (mimics PyTorch Linear default U(-1/sqrt(in), 1/sqrt(in)))
# ---------------------------------------------------------------------------
def init_params(key, input_dim, hidden_dims, output_dim, dtype=jnp.float32):
    dims = [input_dim] + list(hidden_dims) + [output_dim]
    params = []
    for i in range(len(dims) - 1):
        d_in, d_out = dims[i], dims[i + 1]
        key, kw, kb = jax.random.split(key, 3)
        bound = 1.0 / (d_in ** 0.5)
        w = jax.random.uniform(kw, (d_in, d_out), dtype, -bound, bound)  # pre-transposed
        b = jax.random.uniform(kb, (d_out,), dtype, -bound, bound)
        layer = {"w": w, "b": b}
        if i < len(dims) - 2:  # hidden layer: LayerNorm params
            layer["gamma"] = jnp.ones((d_out,), dtype)
            layer["beta"] = jnp.zeros((d_out,), dtype)
        params.append(layer)
    return params


# ---------------------------------------------------------------------------
# Pure-JAX references
# ---------------------------------------------------------------------------
def mlp_reference_f32(x, params):
    """Exact f32 semantics of the PyTorch module (eval mode)."""
    h = x
    for layer in params[:-1]:
        y = jnp.tanh(h @ layer["w"] + layer["b"])
        mean = jnp.mean(y, axis=-1, keepdims=True)
        var = jnp.mean((y - mean) ** 2, axis=-1, keepdims=True)
        h = (y - mean) / jnp.sqrt(var + LN_EPS) * layer["gamma"] + layer["beta"]
    last = params[-1]
    return jax.nn.sigmoid(h @ last["w"] + last["b"])


def mlp_reference_mixed(x, params):
    """Reference matching the kernel's precision: bf16 MXU operands, f32 elsewhere."""
    h = x.astype(jnp.float32)
    for layer in params[:-1]:
        d = layer["w"].shape[1]
        y = jnp.dot(h.astype(jnp.bfloat16), layer["w"].astype(jnp.bfloat16),
                    preferred_element_type=jnp.float32) + layer["b"]
        t = jnp.tanh(y)
        inv_d = 1.0 / float(d)
        mean = jnp.sum(t, axis=-1, keepdims=True) * inv_d
        var = jnp.sum(t * t, axis=-1, keepdims=True) * inv_d - mean * mean
        h = (t - mean) * lax.rsqrt(var + LN_EPS) * layer["gamma"] + layer["beta"]
    last = params[-1]
    y = jnp.dot(h.astype(jnp.bfloat16), last["w"].astype(jnp.bfloat16),
                preferred_element_type=jnp.float32) + last["b"]
    return jax.nn.sigmoid(y)


if __name__ == "__main__":
    key = jax.random.PRNGKey(0)
    k_x, k_p = jax.random.split(key)

    input_dim = 16
    hidden_dims = [48, 32]
    output_dim = 8
    batch = 16        # >=16 -> grid has 2 parallel steps

    x = jax.random.normal(k_x, (batch, input_dim), jnp.float32)
    params = init_params(k_p, input_dim, hidden_dims, output_dim)
    prepped = prepare_params(params, input_dim)

    out = jax.block_until_ready(mlp_forward(x, prepped))
    assert out.shape == (batch, output_dim)

    ref_mixed = mlp_reference_mixed(x, params)   # same precision recipe as the kernel
    ref_f32 = mlp_reference_f32(x, params)       # full-f32 semantic reference
    assert jnp.allclose(out, ref_mixed, atol=3e-3, rtol=3e-3), "mismatch vs mixed-precision reference"
    assert jnp.allclose(out, ref_f32, atol=2e-2, rtol=2e-2), "mismatch vs f32 reference"

    print("KERNEL_OK")
</pallas_src>

<mosaic_0001>
module attributes {stable_mosaic.version = 11 : i64} {
  func.func @k(%arg0: i32, %arg1: memref<8x128xf32, #tpu.memory_space<vmem>>, %arg2: memref<8x128xf32, #tpu.memory_space<vmem>>) attributes {dimension_semantics = [#tpu.dimension_semantics<arbitrary>], iteration_bounds = array<i64: 2>, scalar_prefetch = 0 : i64, scratch_operands = 0 : i64, tpu.core_type = #tpu.core_type<tc>, window_params = [{pipeline_mode = #tpu.pipeline_mode<synchronous>, transform_indices = @transform_0, window_bounds = array<i64: 8, 128>}, {transform_indices = @transform_1, window_bounds = array<i64: 8, 128>}]} {
    %0 = arith.sitofp %arg0 : i32 to f32
    %c0 = arith.constant 0 : index
    %c0_0 = arith.constant 0 : index
    %1 = vector.load %arg1[%c0, %c0_0] : memref<8x128xf32, #tpu.memory_space<vmem>>, vector<8x128xf32>
    %2 = vector.broadcast %0 : f32 to vector<8x128xf32>
    %3 = arith.addf %1, %2 : vector<8x128xf32>
    %c0_1 = arith.constant 0 : index
    %c0_2 = arith.constant 0 : index
    %4 = vector.load %arg2[%c0_1, %c0_2] : memref<8x128xf32, #tpu.memory_space<vmem>>, vector<8x128xf32>
    tpu.vector_store %arg2[%c0_1, %c0_2], %3 {strides = array<i32>} : memref<8x128xf32, #tpu.memory_space<vmem>>, vector<8x128xf32>,
    return
  }
  func.func @transform_0(%arg0: i32) -> (i32, i32) {
    %c0_i32 = arith.constant 0 : i32
    %c0_i32_0 = arith.constant 0 : i32
    %c0_i32_1 = arith.constant 0 : i32
    return %c0_i32, %c0_i32_0 : i32, i32
  }
  func.func @transform_1(%arg0: i32) -> (i32, i32) {
    %c0_i32 = arith.constant 0 : i32
    %c0_i32_0 = arith.constant 0 : i32
    return %arg0, %c0_i32 : i32, i32
  }
}

module attributes {stable_mosaic.version = 11 : i64} {
  func.func @kernel(%arg0: i32, %arg1: memref<8x128xf32, #tpu.memory_space<vmem>>, %arg2: memref<128x128xbf16, #tpu.memory_space<vmem>>, %arg3: memref<1x128xf32, #tpu.memory_space<vmem>>, %arg4: memref<1x128xf32, #tpu.memory_space<vmem>>, %arg5: memref<1x128xf32, #tpu.memory_space<vmem>>, %arg6: memref<128x128xbf16, #tpu.memory_space<vmem>>, %arg7: memref<1x128xf32, #tpu.memory_space<vmem>>, %arg8: memref<1x128xf32, #tpu.memory_space<vmem>>, %arg9: memref<1x128xf32, #tpu.memory_space<vmem>>, %arg10: memref<128x128xbf16, #tpu.memory_space<vmem>>, %arg11: memref<1x128xf32, #tpu.memory_space<vmem>>, %arg12: memref<8x128xf32, #tpu.memory_space<vmem>>) attributes {dimension_semantics = [#tpu.dimension_semantics<parallel>], iteration_bounds = array<i64: 2>, scalar_prefetch = 0 : i64, scratch_operands = 0 : i64, tpu.core_type = #tpu.core_type<tc>, window_params = [{transform_indices = @transform_0, window_bounds = array<i64: 8, 128>}, {pipeline_mode = #tpu.pipeline_mode<synchronous>, transform_indices = @transform_1, window_bounds = array<i64: 128, 128>}, {pipeline_mode = #tpu.pipeline_mode<synchronous>, transform_indices = @transform_2, window_bounds = array<i64: 1, 128>}, {pipeline_mode = #tpu.pipeline_mode<synchronous>, transform_indices = @transform_3, window_bounds = array<i64: 1, 128>}, {pipeline_mode = #tpu.pipeline_mode<synchronous>, transform_indices = @transform_4, window_bounds = array<i64: 1, 128>}, {pipeline_mode = #tpu.pipeline_mode<synchronous>, transform_indices = @transform_5, window_bounds = array<i64: 128, 128>}, {pipeline_mode = #tpu.pipeline_mode<synchronous>, transform_indices = @transform_6, window_bounds = array<i64: 1, 128>}, {pipeline_mode = #tpu.pipeline_mode<synchronous>, transform_indices = @transform_7, window_bounds = array<i64: 1, 128>}, {pipeline_mode = #tpu.pipeline_mode<synchronous>, transform_indices = @transform_8, window_bounds = array<i64: 1, 128>}, {pipeline_mode = #tpu.pipeline_mode<synchronous>, transform_indices = @transform_9, window_bounds = array<i64: 128, 128>}, {pipeline_mode = #tpu.pipeline_mode<synchronous>, transform_indices = @transform_10, window_bounds = array<i64: 1, 128>}, {transform_indices = @transform_11, window_bounds = array<i64: 8, 128>}]} {
    %c0 = arith.constant 0 : index
    %c0_0 = arith.constant 0 : index
    %0 = vector.load %arg1[%c0, %c0_0] : memref<8x128xf32, #tpu.memory_space<vmem>>, vector<8x128xf32>
    %c0_1 = arith.constant 0 : index
    %c0_2 = arith.constant 0 : index
    %1 = vector.load %arg2[%c0_1, %c0_2] : memref<128x128xbf16, #tpu.memory_space<vmem>>, vector<128x128xbf16>
    %c0_3 = arith.constant 0 : index
    %c0_4 = arith.constant 0 : index
    %2 = vector.load %arg3[%c0_3, %c0_4] : memref<1x128xf32, #tpu.memory_space<vmem>>, vector<1x128xf32>
    %c0_5 = arith.constant 0 : index
    %c0_6 = arith.constant 0 : index
    %3 = vector.load %arg4[%c0_5, %c0_6] : memref<1x128xf32, #tpu.memory_space<vmem>>, vector<1x128xf32>
    %c0_7 = arith.constant 0 : index
    %c0_8 = arith.constant 0 : index
    %4 = vector.load %arg5[%c0_7, %c0_8] : memref<1x128xf32, #tpu.memory_space<vmem>>, vector<1x128xf32>
    %5 = arith.truncf %0 : vector<8x128xf32> to vector<8x128xbf16>
    %cst = arith.constant dense<0.000000e+00> : vector<8x128xf32>
    %6 = tpu.matmul %5, %1, %cst {dimension_numbers = #tpu.dot_dimension_numbers<[1], [0], [0], [1], [0, 0, 1, 1], [], []>} : vector<8x128xbf16>, vector<128x128xbf16>, vector<8x128xf32> -> vector<8x128xf32>
    %7 = vector.broadcast %2 : vector<1x128xf32> to vector<8x128xf32>
    %8 = arith.addf %6, %7 : vector<8x128xf32>
    %9 = math.tanh %8 : vector<8x128xf32>
    %cst_9 = arith.constant dense<0.000000e+00> : vector<8xf32>
    %10 = vector.multi_reduction <add>, %9, %cst_9 [1] : vector<8x128xf32> to vector<8xf32>
    %11 = vector.shape_cast %10 : vector<8xf32> to vector<8x1xf32>
    %cst_10 = arith.constant 0.020833334 : f32
    %12 = vector.broadcast %cst_10 : f32 to vector<8x1xf32>
    %13 = arith.mulf %11, %12 : vector<8x1xf32>
    %14 = arith.mulf %9, %9 : vector<8x128xf32>
    %cst_11 = arith.constant dense<0.000000e+00> : vector<8xf32>
    %15 = vector.multi_reduction <add>, %14, %cst_11 [1] : vector<8x128xf32> to vector<8xf32>
    %16 = vector.shape_cast %15 : vector<8xf32> to vector<8x1xf32>
    %cst_12 = arith.constant 0.020833334 : f32
    %17 = vector.broadcast %cst_12 : f32 to vector<8x1xf32>
    %18 = arith.mulf %16, %17 : vector<8x1xf32>
    %19 = arith.mulf %13, %13 : vector<8x1xf32>
    %20 = arith.subf %18, %19 : vector<8x1xf32>
    %21 = vector.broadcast %13 : vector<8x1xf32> to vector<8x128xf32>
    %22 = arith.subf %9, %21 : vector<8x128xf32>
    %cst_13 = arith.constant 9.99999974E-6 : f32
    %23 = vector.broadcast %cst_13 : f32 to vector<8x1xf32>
    %24 = arith.addf %20, %23 : vector<8x1xf32>
    %25 = math.rsqrt %24 : vector<8x1xf32>
    %26 = vector.broadcast %25 : vector<8x1xf32> to vector<8x128xf32>
    %27 = arith.mulf %22, %26 : vector<8x128xf32>
    %28 = vector.broadcast %3 : vector<1x128xf32> to vector<8x128xf32>
    %29 = arith.mulf %27, %28 : vector<8x128xf32>
    %30 = vector.broadcast %4 : vector<1x128xf32> to vector<8x128xf32>
    %31 = arith.addf %29, %30 : vector<8x128xf32>
    %c0_14 = arith.constant 0 : index
    %c0_15 = arith.constant 0 : index
    %32 = vector.load %arg6[%c0_14, %c0_15] : memref<128x128xbf16, #tpu.memory_space<vmem>>, vector<128x128xbf16>
    %c0_16 = arith.constant 0 : index
    %c0_17 = arith.constant 0 : index
    %33 = vector.load %arg7[%c0_16, %c0_17] : memref<1x128xf32, #tpu.memory_space<vmem>>, vector<1x128xf32>
    %c0_18 = arith.constant 0 : index
    %c0_19 = arith.constant 0 : index
    %34 = vector.load %arg8[%c0_18, %c0_19] : memref<1x128xf32, #tpu.memory_space<vmem>>, vector<1x128xf32>
    %c0_20 = arith.constant 0 : index
    %c0_21 = arith.constant 0 : index
    %35 = vector.load %arg9[%c0_20, %c0_21] : memref<1x128xf32, #tpu.memory_space<vmem>>, vector<1x128xf32>
    %36 = arith.truncf %31 : vector<8x128xf32> to vector<8x128xbf16>
    %cst_22 = arith.constant dense<0.000000e+00> : vector<8x128xf32>
    %37 = tpu.matmul %36, %32, %cst_22 {dimension_numbers = #tpu.dot_dimension_numbers<[1], [0], [0], [1], [0, 0, 1, 1], [], []>} : vector<8x128xbf16>, vector<128x128xbf16>, vector<8x128xf32> -> vector<8x128xf32>
    %38 = vector.broadcast %33 : vector<1x128xf32> to vector<8x128xf32>
    %39 = arith.addf %37, %38 : vector<8x128xf32>
    %40 = math.tanh %39 : vector<8x128xf32>
    %cst_23 = arith.constant dense<0.000000e+00> : vector<8xf32>
    %41 = vector.multi_reduction <add>, %40, %cst_23 [1] : vector<8x128xf32> to vector<8xf32>
    %42 = vector.shape_cast %41 : vector<8xf32> to vector<8x1xf32>
    %cst_24 = arith.constant 3.125000e-02 : f32
    %43 = vector.broadcast %cst_24 : f32 to vector<8x1xf32>
    %44 = arith.mulf %42, %43 : vector<8x1xf32>
    %45 = arith.mulf %40, %40 : vector<8x128xf32>
    %cst_25 = arith.constant dense<0.000000e+00> : vector<8xf32>
    %46 = vector.multi_reduction <add>, %45, %cst_25 [1] : vector<8x128xf32> to vector<8xf32>
    %47 = vector.shape_cast %46 : vector<8xf32> to vector<8x1xf32>
    %cst_26 = arith.constant 3.125000e-02 : f32
    %48 = vector.broadcast %cst_26 : f32 to vector<8x1xf32>
    %49 = arith.mulf %47, %48 : vector<8x1xf32>
    %50 = arith.mulf %44, %44 : vector<8x1xf32>
    %51 = arith.subf %49, %50 : vector<8x1xf32>
    %52 = vector.broadcast %44 : vector<8x1xf32> to vector<8x128xf32>
    %53 = arith.subf %40, %52 : vector<8x128xf32>
    %cst_27 = arith.constant 9.99999974E-6 : f32
    %54 = vector.broadcast %cst_27 : f32 to vector<8x1xf32>
    %55 = arith.addf %51, %54 : vector<8x1xf32>
    %56 = math.rsqrt %55 : vector<8x1xf32>
    %57 = vector.broadcast %56 : vector<8x1xf32> to vector<8x128xf32>
    %58 = arith.mulf %53, %57 : vector<8x128xf32>
    %59 = vector.broadcast %34 : vector<1x128xf32> to vector<8x128xf32>
    %60 = arith.mulf %58, %59 : vector<8x128xf32>
    %61 = vector.broadcast %35 : vector<1x128xf32> to vector<8x128xf32>
    %62 = arith.addf %60, %61 : vector<8x128xf32>
    %c0_28 = arith.constant 0 : index
    %c0_29 = arith.constant 0 : index
    %63 = vector.load %arg10[%c0_28, %c0_29] : memref<128x128xbf16, #tpu.memory_space<vmem>>, vector<128x128xbf16>
    %c0_30 = arith.constant 0 : index
    %c0_31 = arith.constant 0 : index
    %64 = vector.load %arg11[%c0_30, %c0_31] : memref<1x128xf32, #tpu.memory_space<vmem>>, vector<1x128xf32>
    %65 = arith.truncf %62 : vector<8x128xf32> to vector<8x128xbf16>
    %cst_32 = arith.constant dense<0.000000e+00> : vector<8x128xf32>
    %66 = tpu.matmul %65, %63, %cst_32 {dimension_numbers = #tpu.dot_dimension_numbers<[1], [0], [0], [1], [0, 0, 1, 1], [], []>} : vector<8x128xbf16>, vector<128x128xbf16>, vector<8x128xf32> -> vector<8x128xf32>
    %67 = vector.broadcast %64 : vector<1x128xf32> to vector<8x128xf32>
    %68 = arith.addf %66, %67 : vector<8x128xf32>
    %69 = arith.negf %68 : vector<8x128xf32>
    %70 = math.exp %69 : vector<8x128xf32>
    %cst_33 = arith.constant 1.000000e+00 : f32
    %71 = vector.broadcast %cst_33 : f32 to vector<8x128xf32>
    %72 = arith.addf %71, %70 : vector<8x128xf32>
    %73 = arith.divf %71, %72 : vector<8x128xf32>
    %c0_34 = arith.constant 0 : index
    %c0_35 = arith.constant 0 : index
    %74 = vector.load %arg12[%c0_34, %c0_35] : memref<8x128xf32, #tpu.memory_space<vmem>>, vector<8x128xf32>
    tpu.vector_store %arg12[%c0_34, %c0_35], %73 {strides = array<i32>} : memref<8x128xf32, #tpu.memory_space<vmem>>, vector<8x128xf32>,
    return
  }
  func.func @transform_0(%arg0: i32) -> (i32, i32) {
    %c0_i32 = arith.constant 0 : i32
    %c0_i32_0 = arith.constant 0 : i32
    return %arg0, %c0_i32 : i32, i32
  }
  func.func @transform_1(%arg0: i32) -> (i32, i32) {
    %c0_i32 = arith.constant 0 : i32
    %c0_i32_0 = arith.constant 0 : i32
    %c0_i32_1 = arith.constant 0 : i32
    return %c0_i32, %c0_i32_0 : i32, i32
  }
  func.func @transform_2(%arg0: i32) -> (i32, i32) {
    %c0_i32 = arith.constant 0 : i32
    %c0_i32_0 = arith.constant 0 : i32
    %c0_i32_1 = arith.constant 0 : i32
    return %c0_i32, %c0_i32_0 : i32, i32
  }
  func.func @transform_3(%arg0: i32) -> (i32, i32) {
    %c0_i32 = arith.constant 0 : i32
    %c0_i32_0 = arith.constant 0 : i32
    %c0_i32_1 = arith.constant 0 : i32
    return %c0_i32, %c0_i32_0 : i32, i32
  }
  func.func @transform_4(%arg0: i32) -> (i32, i32) {
    %c0_i32 = arith.constant 0 : i32
    %c0_i32_0 = arith.constant 0 : i32
    %c0_i32_1 = arith.constant 0 : i32
    return %c0_i32, %c0_i32_0 : i32, i32
  }
  func.func @transform_5(%arg0: i32) -> (i32, i32) {
    %c0_i32 = arith.constant 0 : i32
    %c0_i32_0 = arith.constant 0 : i32
    %c0_i32_1 = arith.constant 0 : i32
    return %c0_i32, %c0_i32_0 : i32, i32
  }
  func.func @transform_6(%arg0: i32) -> (i32, i32) {
    %c0_i32 = arith.constant 0 : i32
    %c0_i32_0 = arith.constant 0 : i32
    %c0_i32_1 = arith.constant 0 : i32
    return %c0_i32, %c0_i32_0 : i32, i32
  }
  func.func @transform_7(%arg0: i32) -> (i32, i32) {
    %c0_i32 = arith.constant 0 : i32
    %c0_i32_0 = arith.constant 0 : i32
    %c0_i32_1 = arith.constant 0 : i32
    return %c0_i32, %c0_i32_0 : i32, i32
  }
  func.func @transform_8(%arg0: i32) -> (i32, i32) {
    %c0_i32 = arith.constant 0 : i32
    %c0_i32_0 = arith.constant 0 : i32
    %c0_i32_1 = arith.constant 0 : i32
    return %c0_i32, %c0_i32_0 : i32, i32
  }
  func.func @transform_9(%arg0: i32) -> (i32, i32) {
    %c0_i32 = arith.constant 0 : i32
    %c0_i32_0 = arith.constant 0 : i32
    %c0_i32_1 = arith.constant 0 : i32
    return %c0_i32, %c0_i32_0 : i32, i32
  }
  func.func @transform_10(%arg0: i32) -> (i32, i32) {
    %c0_i32 = arith.constant 0 : i32
    %c0_i32_0 = arith.constant 0 : i32
    %c0_i32_1 = arith.constant 0 : i32
    return %c0_i32, %c0_i32_0 : i32, i32
  }
  func.func @transform_11(%arg0: i32) -> (i32, i32) {
    %c0_i32 = arith.constant 0 : i32
    %c0_i32_0 = arith.constant 0 : i32
    return %arg0, %c0_i32 : i32, i32
  }
}

</mosaic_0001>

<llo_original>
// kernel: tpu_custom_call.1
$region0: #{tpu_custom_call.1}
  #allocation0 [shape = 'u32[]', space=smem, size = 0x4, offset = 0x4, fixed_abs, tag = 'smem constant byte address 0x4 - core index']
  #allocation1 [shape = 'u32[144,128]{1,0:T(1,128)}', space=vmem, size = 0x12000, scoped, tag = 'internal scratch']
  %s0 = inlined_call_operand.hbm [shape: f32[8,128], index: 0, kind: input, shape index: {}]
  %s1 = inlined_call_operand.hbm [shape: f32[16,128], index: 1, kind: output, shape index: {}]
  %s2 = sld [smem:[#allocation0]]
  $region41: #{tpu_custom_call.1} parent=0
    _
  %s4 = ssub.s32 1, %s2
  %s5 = scalar_select 0, %s4, %s2
  $region1: #{tpu_custom_call.1} parent=0
    #allocation2 [shape = 'u8[4096]{0}', space=vmem, size = 0x1000, scoped, tag = 'input window, operand 0, single buffered']
    #allocation3 [shape = 's32[2]{0}', space=sflag, size = 0x8, scoped, tag = 'scoped memory for tpu_custom_call.1']
    #allocation4 [shape = 's32[2]{0}', space=sflag, size = 0x8, scoped, tag = 'scoped memory for tpu_custom_call.1']
    #allocation5 [shape = 'u8[8192]{0}', space=vmem, size = 0x2000, scoped, tag = 'output window, operand 0']
    %6 = vsyncpa [#allocation3], 0
    %7 = vsyncpa [#allocation4], 0
    %s8 = scalar_lea.sflag [#allocation4], 1
    %9 = vsyncpa %s8, 0
    loop: start=0, step=1, limit=4
    $region2: #{tpu_custom_call.1} parent=1 // loop_pre_header
      _
    $region3: #{tpu_custom_call.1} parent=1 // loop_header
      %s11 = sphi 0, %s15
      %p12 = scmp.ge.s32.totalorder %s11, 4
      %s19 = sphi 0, %s19
      %s21 = sphi 0, %s19
      %s22 = sphi 0, %s21
      %s36 = sphi 0, %s22
      %s42 = sphi 0, %s44
      %s45 = sphi 0, %s42
      %s46 = sphi 0, %s45
      %s62 = sphi 0, %s46
    $region4: #{tpu_custom_call.1} parent=1 // loop_header_branch
      %14 = sbr.rel (%p12) target = $region8
    $region5: #{tpu_custom_call.1} parent=1 // loop_body
      %s16 = ssub.s32 %s11, 1
      %s17 = ssub.s32 %s11, 2
      %s18 = sadd.s32 %s11, 1
      %s20 = sadd.s32 %s19, 1
      %p23 = scmp.eq.s32.totalorder %s11, 1
      %p24 = scmp.ne.s32.totalorder %s19, %s21
      %p25 = scmp.eq.s32.totalorder %s11, 0
      %p26 = por %p24, %p25
      %p27 = scmp.ne.s32.totalorder %s19, %s21
      %p28 = scmp.eq.s32.totalorder %s16, 1
      %p29 = por %p27, %p28
      %p30 = scmp.ne.s32.totalorder %s21, %s22
      %p31 = scmp.eq.s32.totalorder %s16, 0
      %p32 = por %p30, %p31
      %p33 = scmp.ne.s32.totalorder %s21, %s22
      %p34 = scmp.eq.s32.totalorder %s17, 1
      %p35 = por %p33, %p34
      %p37 = scmp.ne.s32.totalorder %s22, %s36
      %p38 = scmp.eq.s32.totalorder %s17, 0
      %p39 = por %p37, %p38
      %s40 = ssub.s32 %s11, %s18
      %p41 = scmp.eq.s32.totalorder %s40, 0
      %s43 = sadd.s32 %s42, 1
      %s44 = scalar_select %p41, %s42, %s43
      %p47 = pneg %p41
      %p48 = scmp.eq.s32.totalorder %s11, 1
      %p49 = por %p47, %p48
      %p50 = scmp.ne.s32.totalorder %s42, %s45
      %p51 = scmp.eq.s32.totalorder %s11, 0
      %p52 = por %p50, %p51
      %p53 = scmp.ne.s32.totalorder %s42, %s45
      %p54 = scmp.eq.s32.totalorder %s16, 1
      %p55 = por %p53, %p54
      %p56 = scmp.ne.s32.totalorder %s45, %s46
      %p57 = scmp.eq.s32.totalorder %s16, 0
      %p58 = por %p56, %p57
      %p59 = scmp.ne.s32.totalorder %s45, %s46
      %p60 = scmp.eq.s32.totalorder %s17, 1
      %p61 = por %p59, %p60
      %p63 = scmp.ne.s32.totalorder %s46, %s62
      %p64 = scmp.eq.s32.totalorder %s17, 0
      %p65 = por %p63, %p64
      %p66 = scmp.le.s32.totalorder 1, %s11
      %p67 = scmp.lt.s32.totalorder %s11, 3
      %p68 = pnand %p66, %p67
      %p69 = pneg %p68
      // Predicated region
      $region9: #{tpu_custom_call.1} parent=5 // pred_check
        _
      $region10: #{tpu_custom_call.1} parent=5 // pred_check_branch
        %71 = sbr.rel (%p68) target = $region12
      $region11: #{tpu_custom_call.1} parent=5 // pred_region
        %s72 = ssub.s32 %s11, 1
        // Predicated region
        $region13: #{tpu_custom_call.1} parent=11 // pred_check
          %p73 = pneg %p32
        $region14: #{tpu_custom_call.1} parent=11 // pred_check_branch
          %75 = sbr.rel (%p73) target = $region16
        $region15: #{tpu_custom_call.1} parent=11 // pred_region
          %s77 = ssub.s32 128, 128
          %78 = vsyncadd [#allocation3], %s77
          %s80 = sshll.u32 [#allocation2], 4
          %s81 = int_to_ptr.vmem [resolvable:$true] %s80
          %83 = dma.hbm_to_vmem [thread:$0]  %s0, 128, %s81, [#allocation3]
        $region16: #{tpu_custom_call.1} parent=11 // pred_fallthru
          _
      $region12: #{tpu_custom_call.1} parent=5 // pred_fallthru
        _
      %p84 = scmp.lt.s32.totalorder %s11, 2
      // Predicated region
      $region17: #{tpu_custom_call.1} parent=5 // pred_check
        %p85 = pneg %p84
      $region18: #{tpu_custom_call.1} parent=5 // pred_check_branch
        %87 = sbr.rel (%p85) target = $region20
      $region19: #{tpu_custom_call.1} parent=5 // pred_region
        _
      $region20: #{tpu_custom_call.1} parent=5 // pred_fallthru
        _
      %p88 = scmp.le.s32.totalorder 1, %s11
      %p89 = scmp.lt.s32.totalorder %s11, 3
      %p90 = pnand %p88, %p89
      %p91 = pneg %p90
      // Predicated region
      $region21: #{tpu_custom_call.1} parent=5 // pred_check
        _
      $region22: #{tpu_custom_call.1} parent=5 // pred_check_branch
        %93 = sbr.rel (%p90) target = $region24
      $region23: #{tpu_custom_call.1} parent=5 // pred_region
        %s94 = ssub.s32 %s11, 1
        // Predicated region
        $region25: #{tpu_custom_call.1} parent=23 // pred_check
          %p95 = pneg %p32
        $region26: #{tpu_custom_call.1} parent=23 // pred_check_branch
          %97 = sbr.rel (%p95) target = $region28
        $region27: #{tpu_custom_call.1} parent=23 // pred_region
          %98 = dma.done [#allocation3], 128
        $region28: #{tpu_custom_call.1} parent=23 // pred_fallthru
          _
        %p99 = pneg %p32
        %p100 = pneg %p29
        %p101 = pneg %p58
        %p102 = pneg %p55
        %s103 = sand.u32 %s45, 1
        %s104 = scalar_lea.sflag [#allocation4], %s103
        %s105 = sand.u32 %s45, 1
        %s106 = smul.addr %s105, 8
        %s107 = scalar_lea.vmem [#allocation5], %s106
        %s108 = scvt.s32.f32 %s16
        %v109 = vld [vmem:[#allocation2] sm:$0xff]
        %v110 = vstv %s108
        %v111 = vadd.f32 %v109, %v110
        %112 = vst [vmem:[%s107] sm:$0xff] %v111
        %s113 = sand.u32 %s45, 1
        %s114 = scalar_lea.sflag [#allocation4], %s113
        %s115 = sand.u32 %s45, 1
        %s116 = smul.addr %s115, 8
        %s117 = scalar_lea.vmem [#allocation5], %s116
        // Predicated region
        $region29: #{tpu_custom_call.1} parent=23 // pred_check
          %p118 = pneg %p55
        $region30: #{tpu_custom_call.1} parent=23 // pred_check_branch
          %120 = sbr.rel (%p118) target = $region32
        $region31: #{tpu_custom_call.1} parent=23 // pred_region
          %s122 = ssub.s32 128, 128
          %123 = vsyncadd %s114, %s122
          %s124 = smul.addr %s16, 128
          %s125 = scalar_lea.hbm %s1, %s124
          %s127 = sshll.u32 %s117, 4
          %s128 = int_to_ptr.vmem [resolvable:$true] %s127
          %130 = dma.vmem_to_hbm [thread:$0]  %s128, 128, %s125, %s114
        $region32: #{tpu_custom_call.1} parent=23 // pred_fallthru
          _
      $region24: #{tpu_custom_call.1} parent=5 // pred_fallthru
        _
      %p131 = scmp.le.s32.totalorder 2, %s11
      // Predicated region
      $region33: #{tpu_custom_call.1} parent=5 // pred_check
        %p132 = pneg %p131
      $region34: #{tpu_custom_call.1} parent=5 // pred_check_branch
        %134 = sbr.rel (%p132) target = $region36
      $region35: #{tpu_custom_call.1} parent=5 // pred_region
        %s135 = ssub.s32 %s11, 2
        // Predicated region
        $region37: #{tpu_custom_call.1} parent=35 // pred_check
          %p136 = pneg %p61
        $region38: #{tpu_custom_call.1} parent=35 // pred_check_branch
          %138 = sbr.rel (%p136) target = $region40
        $region39: #{tpu_custom_call.1} parent=35 // pred_region
          %s139 = sand.u32 %s46, 1
          %s140 = scalar_lea.sflag [#allocation4], %s139
          %s141 = sand.u32 %s46, 1
          %s142 = smul.addr %s141, 8
          %s143 = scalar_lea.vmem [#allocation5], %s142
          %144 = dma.done %s140, 128
        $region40: #{tpu_custom_call.1} parent=35 // pred_fallthru
          _
      $region36: #{tpu_custom_call.1} parent=5 // pred_fallthru
        _
    $region6: #{tpu_custom_call.1} parent=1 // loop_footer
      %s15 = sadd.s32 1, %s11
    $region7: #{tpu_custom_call.1} parent=1 // loop_footer_branch
      %10 = sbr.rel target = $region3
    $region8: #{tpu_custom_call.1} parent=1 // loop_exit
      _
    %145 = vsyncpa [#allocation3], 1
    %s146 = scalar_lea.sflag [#allocation3], 1
    %147 = vsyncpa %s146, 1
    %148 = vsyncpa [#allocation4], 1
    %s149 = scalar_lea.sflag [#allocation4], 1
    %150 = vsyncpa %s149, 1

// kernel: _forward_impl.1
$region0: #{_forward_impl.1}
  #allocation0 [shape = 'u32[]', space=smem, size = 0x4, offset = 0x4, fixed_abs, tag = 'smem constant byte address 0x4 - core index']
  #allocation1 [shape = 'u32[144,128]{1,0:T(1,128)}', space=vmem, size = 0x12000, scoped, tag = 'internal scratch']
  %s0 = inlined_call_operand.vmem [shape: f32[16,128], index: 0, kind: input, shape index: {}]
  %s1 = inlined_call_operand.vmem [shape: bf16[128,128], index: 1, kind: input, shape index: {}]
  %s2 = inlined_call_operand.vmem [shape: f32[1,128], index: 2, kind: input, shape index: {}]
  %s3 = inlined_call_operand.vmem [shape: f32[1,128], index: 3, kind: input, shape index: {}]
  %s4 = inlined_call_operand.vmem [shape: f32[1,128], index: 4, kind: input, shape index: {}]
  %s5 = inlined_call_operand.hbm [shape: bf16[128,128], index: 5, kind: input, shape index: {}]
  %s6 = inlined_call_operand.vmem [shape: f32[1,128], index: 6, kind: input, shape index: {}]
  %s7 = inlined_call_operand.vmem [shape: f32[1,128], index: 7, kind: input, shape index: {}]
  %s8 = inlined_call_operand.vmem [shape: f32[1,128], index: 8, kind: input, shape index: {}]
  %s9 = inlined_call_operand.hbm [shape: bf16[128,128], index: 9, kind: input, shape index: {}]
  %s10 = inlined_call_operand.vmem [shape: f32[1,128], index: 10, kind: input, shape index: {}]
  %s11 = inlined_call_operand.vmem [shape: f32[16,128], index: 11, kind: output, shape index: {}]
  %s12 = sld [smem:[#allocation0]]
  $region85: #{_forward_impl.1} parent=0
    _
  %s14 = ssub.s32 1, %s12
  %s15 = scalar_select 0, %s14, %s12
  $region1: #{_forward_impl.1} parent=0
    #allocation2 [shape = 'u8[32768]{0}', space=vmem, size = 0x8000, scoped, tag = 'input window, operand 5, single buffered']
    #allocation3 [shape = 's32[2]{0}', space=sflag, size = 0x8, scoped, tag = 'scoped memory for _forward_impl.1']
    #allocation4 [shape = 'u8[32768]{0}', space=vmem, size = 0x8000, scoped, tag = 'input window, operand 9, single buffered']
    #allocation5 [shape = 's32[1]{0}', space=sflag, size = 0x4, scoped, tag = 'scoped memory for _forward_impl.1']
    %16 = vsyncpa [#allocation3], 0
    %17 = vsyncpa [#allocation5], 0
    loop: start=0, step=1, limit=4
    $region2: #{_forward_impl.1} parent=1 // loop_pre_header
      _
    $region3: #{_forward_impl.1} parent=1 // loop_header
      %s19 = sphi 0, %s23
      %p20 = scmp.ge.s32.totalorder %s19, 4
      %s29 = sphi 0, %s31
      %s32 = sphi 0, %s29
      %s33 = sphi 0, %s32
      %s49 = sphi 0, %s33
      %s53 = sphi 0, %s53
      %s55 = sphi 0, %s53
      %s56 = sphi 0, %s55
      %s70 = sphi 0, %s56
      %s74 = sphi 0, %s74
      %s76 = sphi 0, %s74
      %s77 = sphi 0, %s76
      %s91 = sphi 0, %s77
      %s95 = sphi 0, %s95
      %s97 = sphi 0, %s95
      %s98 = sphi 0, %s97
      %s112 = sphi 0, %s98
      %s116 = sphi 0, %s116
      %s118 = sphi 0, %s116
      %s119 = sphi 0, %s118
      %s133 = sphi 0, %s119
      %s137 = sphi 0, %s137
      %s139 = sphi 0, %s137
      %s140 = sphi 0, %s139
      %s154 = sphi 0, %s140
      %s158 = sphi 0, %s158
      %s160 = sphi 0, %s158
      %s161 = sphi 0, %s160
      %s175 = sphi 0, %s161
      %s179 = sphi 0, %s179
      %s181 = sphi 0, %s179
      %s182 = sphi 0, %s181
      %s196 = sphi 0, %s182
      %s200 = sphi 0, %s200
      %s202 = sphi 0, %s200
      %s203 = sphi 0, %s202
      %s217 = sphi 0, %s203
      %s221 = sphi 0, %s221
      %s223 = sphi 0, %s221
      %s224 = sphi 0, %s223
      %s238 = sphi 0, %s224
      %s242 = sphi 0, %s242
      %s244 = sphi 0, %s242
      %s245 = sphi 0, %s244
      %s259 = sphi 0, %s245
      %s265 = sphi 0, %s267
      %s268 = sphi 0, %s265
      %s269 = sphi 0, %s268
      %s285 = sphi 0, %s269
    $region4: #{_forward_impl.1} parent=1 // loop_header_branch
      %22 = sbr.rel (%p20) target = $region8
    $region5: #{_forward_impl.1} parent=1 // loop_body
      %s24 = ssub.s32 %s19, 1
      %s25 = ssub.s32 %s19, 2
      %s26 = sadd.s32 %s19, 1
      %s27 = ssub.s32 %s19, %s26
      %p28 = scmp.eq.s32.totalorder %s27, 0
      %s30 = sadd.s32 %s29, 1
      %s31 = scalar_select %p28, %s29, %s30
      %p34 = pneg %p28
      %p35 = scmp.eq.s32.totalorder %s19, 1
      %p36 = por %p34, %p35
      %p37 = scmp.ne.s32.totalorder %s29, %s32
      %p38 = scmp.eq.s32.totalorder %s19, 0
      %p39 = por %p37, %p38
      %p40 = scmp.ne.s32.totalorder %s29, %s32
      %p41 = scmp.eq.s32.totalorder %s24, 1
      %p42 = por %p40, %p41
      %p43 = scmp.ne.s32.totalorder %s32, %s33
      %p44 = scmp.eq.s32.totalorder %s24, 0
      %p45 = por %p43, %p44
      %p46 = scmp.ne.s32.totalorder %s32, %s33
      %p47 = scmp.eq.s32.totalorder %s25, 1
      %p48 = por %p46, %p47
      %p50 = scmp.ne.s32.totalorder %s33, %s49
      %p51 = scmp.eq.s32.totalorder %s25, 0
      %p52 = por %p50, %p51
      %s54 = sadd.s32 %s53, 1
      %p57 = scmp.eq.s32.totalorder %s19, 1
      %p58 = scmp.ne.s32.totalorder %s53, %s55
      %p59 = scmp.eq.s32.totalorder %s19, 0
      %p60 = por %p58, %p59
      %p61 = scmp.ne.s32.totalorder %s53, %s55
      %p62 = scmp.eq.s32.totalorder %s24, 1
      %p63 = por %p61, %p62
      %p64 = scmp.ne.s32.totalorder %s55, %s56
      %p65 = scmp.eq.s32.totalorder %s24, 0
      %p66 = por %p64, %p65
      %p67 = scmp.ne.s32.totalorder %s55, %s56
      %p68 = scmp.eq.s32.totalorder %s25, 1
      %p69 = por %p67, %p68
      %p71 = scmp.ne.s32.totalorder %s56, %s70
      %p72 = scmp.eq.s32.totalorder %s25, 0
      %p73 = por %p71, %p72
      %s75 = sadd.s32 %s74, 1
      %p78 = scmp.eq.s32.totalorder %s19, 1
      %p79 = scmp.ne.s32.totalorder %s74, %s76
      %p80 = scmp.eq.s32.totalorder %s19, 0
      %p81 = por %p79, %p80
      %p82 = scmp.ne.s32.totalorder %s74, %s76
      %p83 = scmp.eq.s32.totalorder %s24, 1
      %p84 = por %p82, %p83
      %p85 = scmp.ne.s32.totalorder %s76, %s77
      %p86 = scmp.eq.s32.totalorder %s24, 0
      %p87 = por %p85, %p86
      %p88 = scmp.ne.s32.totalorder %s76, %s77
      %p89 = scmp.eq.s32.totalorder %s25, 1
      %p90 = por %p88, %p89
      %p92 = scmp.ne.s32.totalorder %s77, %s91
      %p93 = scmp.eq.s32.totalorder %s25, 0
      %p94 = por %p92, %p93
      %s96 = sadd.s32 %s95, 1
      %p99 = scmp.eq.s32.totalorder %s19, 1
      %p100 = scmp.ne.s32.totalorder %s95, %s97
      %p101 = scmp.eq.s32.totalorder %s19, 0
      %p102 = por %p100, %p101
      %p103 = scmp.ne.s32.totalorder %s95, %s97
      %p104 = scmp.eq.s32.totalorder %s24, 1
      %p105 = por %p103, %p104
      %p106 = scmp.ne.s32.totalorder %s97, %s98
      %p107 = scmp.eq.s32.totalorder %s24, 0
      %p108 = por %p106, %p107
      %p109 = scmp.ne.s32.totalorder %s97, %s98
      %p110 = scmp.eq.s32.totalorder %s25, 1
      %p111 = por %p109, %p110
      %p113 = scmp.ne.s32.totalorder %s98, %s112
      %p114 = scmp.eq.s32.totalorder %s25, 0
      %p115 = por %p113, %p114
      %s117 = sadd.s32 %s116, 1
      %p120 = scmp.eq.s32.totalorder %s19, 1
      %p121 = scmp.ne.s32.totalorder %s116, %s118
      %p122 = scmp.eq.s32.totalorder %s19, 0
      %p123 = por %p121, %p122
      %p124 = scmp.ne.s32.totalorder %s116, %s118
      %p125 = scmp.eq.s32.totalorder %s24, 1
      %p126 = por %p124, %p125
      %p127 = scmp.ne.s32.totalorder %s118, %s119
      %p128 = scmp.eq.s32.totalorder %s24, 0
      %p129 = por %p127, %p128
      %p130 = scmp.ne.s32.totalorder %s118, %s119
      %p131 = scmp.eq.s32.totalorder %s25, 1
      %p132 = por %p130, %p131
      %p134 = scmp.ne.s32.totalorder %s119, %s133
      %p135 = scmp.eq.s32.totalorder %s25, 0
      %p136 = por %p134, %p135
      %s138 = sadd.s32 %s137, 1
      %p141 = scmp.eq.s32.totalorder %s19, 1
      %p142 = scmp.ne.s32.totalorder %s137, %s139
      %p143 = scmp.eq.s32.totalorder %s19, 0
      %p144 = por %p142, %p143
      %p145 = scmp.ne.s32.totalorder %s137, %s139
      %p146 = scmp.eq.s32.totalorder %s24, 1
      %p147 = por %p145, %p146
      %p148 = scmp.ne.s32.totalorder %s139, %s140
      %p149 = scmp.eq.s32.totalorder %s24, 0
      %p150 = por %p148, %p149
      %p151 = scmp.ne.s32.totalorder %s139, %s140
      %p152 = scmp.eq.s32.totalorder %s25, 1
      %p153 = por %p151, %p152
      %p155 = scmp.ne.s32.totalorder %s140, %s154
      %p156 = scmp.eq.s32.totalorder %s25, 0
      %p157 = por %p155, %p156
      %s159 = sadd.s32 %s158, 1
      %p162 = scmp.eq.s32.totalorder %s19, 1
      %p163 = scmp.ne.s32.totalorder %s158, %s160
      %p164 = scmp.eq.s32.totalorder %s19, 0
      %p165 = por %p163, %p164
      %p166 = scmp.ne.s32.totalorder %s158, %s160
      %p167 = scmp.eq.s32.totalorder %s24, 1
      %p168 = por %p166, %p167
      %p169 = scmp.ne.s32.totalorder %s160, %s161
      %p170 = scmp.eq.s32.totalorder %s24, 0
      %p171 = por %p169, %p170
      %p172 = scmp.ne.s32.totalorder %s160, %s161
      %p173 = scmp.eq.s32.totalorder %s25, 1
      %p174 = por %p172, %p173
      %p176 = scmp.ne.s32.totalorder %s161, %s175
      %p177 = scmp.eq.s32.totalorder %s25, 0
      %p178 = por %p176, %p177
      %s180 = sadd.s32 %s179, 1
      %p183 = scmp.eq.s32.totalorder %s19, 1
      %p184 = scmp.ne.s32.totalorder %s179, %s181
      %p185 = scmp.eq.s32.totalorder %s19, 0
      %p186 = por %p184, %p185
      %p187 = scmp.ne.s32.totalorder %s179, %s181
      %p188 = scmp.eq.s32.totalorder %s24, 1
      %p189 = por %p187, %p188
      %p190 = scmp.ne.s32.totalorder %s181, %s182
      %p191 = scmp.eq.s32.totalorder %s24, 0
      %p192 = por %p190, %p191
      %p193 = scmp.ne.s32.totalorder %s181, %s182
      %p194 = scmp.eq.s32.totalorder %s25, 1
      %p195 = por %p193, %p194
      %p197 = scmp.ne.s32.totalorder %s182, %s196
      %p198 = scmp.eq.s32.totalorder %s25, 0
      %p199 = por %p197, %p198
      %s201 = sadd.s32 %s200, 1
      %p204 = scmp.eq.s32.totalorder %s19, 1
      %p205 = scmp.ne.s32.totalorder %s200, %s202
      %p206 = scmp.eq.s32.totalorder %s19, 0
      %p207 = por %p205, %p206
      %p208 = scmp.ne.s32.totalorder %s200, %s202
      %p209 = scmp.eq.s32.totalorder %s24, 1
      %p210 = por %p208, %p209
      %p211 = scmp.ne.s32.totalorder %s202, %s203
      %p212 = scmp.eq.s32.totalorder %s24, 0
      %p213 = por %p211, %p212
      %p214 = scmp.ne.s32.totalorder %s202, %s203
      %p215 = scmp.eq.s32.totalorder %s25, 1
      %p216 = por %p214, %p215
      %p218 = scmp.ne.s32.totalorder %s203, %s217
      %p219 = scmp.eq.s32.totalorder %s25, 0
      %p220 = por %p218, %p219
      %s222 = sadd.s32 %s221, 1
      %p225 = scmp.eq.s32.totalorder %s19, 1
      %p226 = scmp.ne.s32.totalorder %s221, %s223
      %p227 = scmp.eq.s32.totalorder %s19, 0
      %p228 = por %p226, %p227
      %p229 = scmp.ne.s32.totalorder %s221, %s223
      %p230 = scmp.eq.s32.totalorder %s24, 1
      %p231 = por %p229, %p230
      %p232 = scmp.ne.s32.totalorder %s223, %s224
      %p233 = scmp.eq.s32.totalorder %s24, 0
      %p234 = por %p232, %p233
      %p235 = scmp.ne.s32.totalorder %s223, %s224
      %p236 = scmp.eq.s32.totalorder %s25, 1
      %p237 = por %p235, %p236
      %p239 = scmp.ne.s32.totalorder %s224, %s238
      %p240 = scmp.eq.s32.totalorder %s25, 0
      %p241 = por %p239, %p240
      %s243 = sadd.s32 %s242, 1
      %p246 = scmp.eq.s32.totalorder %s19, 1
      %p247 = scmp.ne.s32.totalorder %s242, %s244
      %p248 = scmp.eq.s32.totalorder %s19, 0
      %p249 = por %p247, %p248
      %p250 = scmp.ne.s32.totalorder %s242, %s244
      %p251 = scmp.eq.s32.totalorder %s24, 1
      %p252 = por %p250, %p251
      %p253 = scmp.ne.s32.totalorder %s244, %s245
      %p254 = scmp.eq.s32.totalorder %s24, 0
      %p255 = por %p253, %p254
      %p256 = scmp.ne.s32.totalorder %s244, %s245
      %p257 = scmp.eq.s32.totalorder %s25, 1
      %p258 = por %p256, %p257
      %p260 = scmp.ne.s32.totalorder %s245, %s259
      %p261 = scmp.eq.s32.totalorder %s25, 0
      %p262 = por %p260, %p261
      %s263 = ssub.s32 %s19, %s26
      %p264 = scmp.eq.s32.totalorder %s263, 0
      %s266 = sadd.s32 %s265, 1
      %s267 = scalar_select %p264, %s265, %s266
      %p270 = pneg %p264
      %p271 = scmp.eq.s32.totalorder %s19, 1
      %p272 = por %p270, %p271
      %p273 = scmp.ne.s32.totalorder %s265, %s268
      %p274 = scmp.eq.s32.totalorder %s19, 0
      %p275 = por %p273, %p274
      %p276 = scmp.ne.s32.totalorder %s265, %s268
      %p277 = scmp.eq.s32.totalorder %s24, 1
      %p278 = por %p276, %p277
      %p279 = scmp.ne.s32.totalorder %s268, %s269
      %p280 = scmp.eq.s32.totalorder %s24, 0
      %p281 = por %p279, %p280
      %p282 = scmp.ne.s32.totalorder %s268, %s269
      %p283 = scmp.eq.s32.totalorder %s25, 1
      %p284 = por %p282, %p283
      %p286 = scmp.ne.s32.totalorder %s269, %s285
      %p287 = scmp.eq.s32.totalorder %s25, 0
      %p288 = por %p286, %p287
      %p289 = scmp.le.s32.totalorder 1, %s19
      %p290 = scmp.lt.s32.totalorder %s19, 3
      %p291 = pnand %p289, %p290
      %p292 = pneg %p291
      // Predicated region
      $region9: #{_forward_impl.1} parent=5 // pred_check
        _
      $region10: #{_forward_impl.1} parent=5 // pred_check_branch
        %294 = sbr.rel (%p291) target = $region12
      $region11: #{_forward_impl.1} parent=5 // pred_region
        %s295 = ssub.s32 %s19, 1
        // Predicated region
        $region13: #{_forward_impl.1} parent=11 // pred_check
          %p296 = pneg %p66
        $region14: #{_forward_impl.1} parent=11 // pred_check_branch
          %298 = sbr.rel (%p296) target = $region16
        $region15: #{_forward_impl.1} parent=11 // pred_region
          _
        $region16: #{_forward_impl.1} parent=11 // pred_fallthru
          _
        // Predicated region
        $region17: #{_forward_impl.1} parent=11 // pred_check
          %p299 = pneg %p87
        $region18: #{_forward_impl.1} parent=11 // pred_check_branch
          %301 = sbr.rel (%p299) target = $region20
        $region19: #{_forward_impl.1} parent=11 // pred_region
          _
        $region20: #{_forward_impl.1} parent=11 // pred_fallthru
          _
        // Predicated region
        $region21: #{_forward_impl.1} parent=11 // pred_check
          %p302 = pneg %p108
        $region22: #{_forward_impl.1} parent=11 // pred_check_branch
          %304 = sbr.rel (%p302) target = $region24
        $region23: #{_forward_impl.1} parent=11 // pred_region
          _
        $region24: #{_forward_impl.1} parent=11 // pred_fallthru
          _
        // Predicated region
        $region25: #{_forward_impl.1} parent=11 // pred_check
          %p305 = pneg %p129
        $region26: #{_forward_impl.1} parent=11 // pred_check_branch
          %307 = sbr.rel (%p305) target = $region28
        $region27: #{_forward_impl.1} parent=11 // pred_region
          _
        $region28: #{_forward_impl.1} parent=11 // pred_fallthru
          _
        // Predicated region
        $region29: #{_forward_impl.1} parent=11 // pred_check
          %p308 = pneg %p150
        $region30: #{_forward_impl.1} parent=11 // pred_check_branch
          %310 = sbr.rel (%p308) target = $region32
        $region31: #{_forward_impl.1} parent=11 // pred_region
          %s312 = ssub.s32 1024, 1024
          %313 = vsyncadd [#allocation3], %s312
          %s314 = sshll.u32 [#allocation2], 4
          %s315 = int_to_ptr.vmem [resolvable:$true] %s314
          %320 = dma.hbm_to_vmem [thread:$0]  %s5, 1024, %s315, [#allocation3], 64, 64, 4
        $region32: #{_forward_impl.1} parent=11 // pred_fallthru
          _
        // Predicated region
        $region33: #{_forward_impl.1} parent=11 // pred_check
          %p321 = pneg %p171
        $region34: #{_forward_impl.1} parent=11 // pred_check_branch
          %323 = sbr.rel (%p321) target = $region36
        $region35: #{_forward_impl.1} parent=11 // pred_region
          _
        $region36: #{_forward_impl.1} parent=11 // pred_fallthru
          _
        // Predicated region
        $region37: #{_forward_impl.1} parent=11 // pred_check
          %p324 = pneg %p192
        $region38: #{_forward_impl.1} parent=11 // pred_check_branch
          %326 = sbr.rel (%p324) target = $region40
        $region39: #{_forward_impl.1} parent=11 // pred_region
          _
        $region40: #{_forward_impl.1} parent=11 // pred_fallthru
          _
        // Predicated region
        $region41: #{_forward_impl.1} parent=11 // pred_check
          %p327 = pneg %p213
        $region42: #{_forward_impl.1} parent=11 // pred_check_branch
          %329 = sbr.rel (%p327) target = $region44
        $region43: #{_forward_impl.1} parent=11 // pred_region
          _
        $region44: #{_forward_impl.1} parent=11 // pred_fallthru
          _
        // Predicated region
        $region45: #{_forward_impl.1} parent=11 // pred_check
          %p330 = pneg %p234
        $region46: #{_forward_impl.1} parent=11 // pred_check_branch
          %332 = sbr.rel (%p330) target = $region48
        $region47: #{_forward_impl.1} parent=11 // pred_region
          %s334 = ssub.s32 1024, 1024
          %335 = vsyncadd [#allocation5], %s334
          %s336 = sshll.u32 [#allocation4], 4
          %s337 = int_to_ptr.vmem [resolvable:$true] %s336
          %342 = dma.hbm_to_vmem [thread:$0]  %s9, 1024, %s337, [#allocation5], 64, 64, 4
        $region48: #{_forward_impl.1} parent=11 // pred_fallthru
          _
        // Predicated region
        $region49: #{_forward_impl.1} parent=11 // pred_check
          %p343 = pneg %p255
        $region50: #{_forward_impl.1} parent=11 // pred_check_branch
          %345 = sbr.rel (%p343) target = $region52
        $region51: #{_forward_impl.1} parent=11 // pred_region
          _
        $region52: #{_forward_impl.1} parent=11 // pred_fallthru
          _
      $region12: #{_forward_impl.1} parent=5 // pred_fallthru
        _
      %p346 = scmp.lt.s32.totalorder %s19, 2
      // Predicated region
      $region53: #{_forward_impl.1} parent=5 // pred_check
        %p347 = pneg %p346
      $region54: #{_forward_impl.1} parent=5 // pred_check_branch
        %349 = sbr.rel (%p347) target = $region56
      $region55: #{_forward_impl.1} parent=5 // pred_region
        // Predicated region
        $region57: #{_forward_impl.1} parent=55 // pred_check
          %p350 = pneg %p39
        $region58: #{_forward_impl.1} parent=55 // pred_check_branch
          %352 = sbr.rel (%p350) target = $region60
        $region59: #{_forward_impl.1} parent=55 // pred_region
          %p353 = scmp.lt.s32.totalorder %s19, 1
          %s354 = scalar_select %p353, %s19, 1
          %s355 = smul.addr %s354, 8
          %s356 = scalar_lea.vmem %s0, %s355
        $region60: #{_forward_impl.1} parent=55 // pred_fallthru
          _
      $region56: #{_forward_impl.1} parent=5 // pred_fallthru
        _
      %p357 = scmp.le.s32.totalorder 1, %s19
      %p358 = scmp.lt.s32.totalorder %s19, 3
      %p359 = pnand %p357, %p358
      %p360 = pneg %p359
      // Predicated region
      $region61: #{_forward_impl.1} parent=5 // pred_check
        _
      $region62: #{_forward_impl.1} parent=5 // pred_check_branch
        %362 = sbr.rel (%p359) target = $region64
      $region63: #{_forward_impl.1} parent=5 // pred_region
        %s363 = ssub.s32 %s19, 1
        // Predicated region
        $region65: #{_forward_impl.1} parent=63 // pred_check
          %p364 = pneg %p150
        $region66: #{_forward_impl.1} parent=63 // pred_check_branch
          %366 = sbr.rel (%p364) target = $region68
        $region67: #{_forward_impl.1} parent=63 // pred_region
          %367 = dma.done [#allocation3], 1024
        $region68: #{_forward_impl.1} parent=63 // pred_fallthru
          _
        // Predicated region
        $region69: #{_forward_impl.1} parent=63 // pred_check
          %p368 = pneg %p234
        $region70: #{_forward_impl.1} parent=63 // pred_check_branch
          %370 = sbr.rel (%p368) target = $region72
        $region71: #{_forward_impl.1} parent=63 // pred_region
          %371 = dma.done [#allocation5], 1024
        $region72: #{_forward_impl.1} parent=63 // pred_fallthru
          _
        %p372 = scmp.lt.s32.totalorder %s24, 1
        %s373 = scalar_select %p372, %s24, 1
        %s374 = smul.addr %s373, 8
        %s375 = scalar_lea.vmem %s0, %s374
        %p376 = pneg %p45
        %p377 = pneg %p42
        %p378 = pneg %p66
        %p379 = pneg %p63
        %p380 = pneg %p87
        %p381 = pneg %p84
        %p382 = pneg %p108
        %p383 = pneg %p105
        %p384 = pneg %p129
        %p385 = pneg %p126
        %p386 = pneg %p150
        %p387 = pneg %p147
        %p388 = pneg %p171
        %p389 = pneg %p168
        %p390 = pneg %p192
        %p391 = pneg %p189
        %p392 = pneg %p213
        %p393 = pneg %p210
        %p394 = pneg %p234
        %p395 = pneg %p231
        %p396 = pneg %p255
        %p397 = pneg %p252
        %p398 = pneg %p281
        %p399 = pneg %p278
        %p400 = scmp.lt.s32.totalorder %s24, 1
        %s401 = scalar_select %p400, %s24, 1
        %s402 = smul.addr %s401, 8
        %s403 = scalar_lea.vmem %s11, %s402
        %p404 = scmp.lt.s32.totalorder %s24, 1
        %s405 = scalar_select %p404, %s24, 1
        %s406 = smul.addr %s405, 8
        %s407 = scalar_lea.vmem %s0, %s406
        %p408 = scmp.lt.s32.totalorder %s24, 1
        %s409 = scalar_select %p408, %s24, 1
        %s410 = smul.addr %s409, 8
        %s411 = scalar_lea.vmem %s11, %s410
        %v413 = vld [vmem:[%s407] sm:$0xff]
        %v414 = vld [vmem:[%s1] sm:$0xf]
        %v415 = vld [vmem:[%s1 + $0x4] sm:$0xf]
        %v416 = vld [vmem:[%s1 + $0x8] sm:$0xf]
        %v417 = vld [vmem:[%s1 + $0xc] sm:$0xf]
        %v418 = vld [vmem:[%s1 + $0x10] sm:$0xf]
        %v419 = vld [vmem:[%s1 + $0x14] sm:$0xf]
        %v420 = vld [vmem:[%s1 + $0x18] sm:$0xf]
        %v421 = vld [vmem:[%s1 + $0x1c] sm:$0xf]
        %v422 = vld [vmem:[%s1 + $0x20] sm:$0xf]
        %v423 = vld [vmem:[%s1 + $0x24] sm:$0xf]
        %v424 = vld [vmem:[%s1 + $0x28] sm:$0xf]
        %v425 = vld [vmem:[%s1 + $0x2c] sm:$0xf]
        %v426 = vld [vmem:[%s1 + $0x30] sm:$0xf]
        %v427 = vld [vmem:[%s1 + $0x34] sm:$0xf]
        %v428 = vld [vmem:[%s1 + $0x38] sm:$0xf]
        %v429 = vld [vmem:[%s1 + $0x3c] sm:$0xf]
        %v430 = vld [vmem:[%s2] sm:$0x1]
        %v431 = vld [vmem:[%s3] sm:$0x1]
        %v432 = vld [vmem:[%s4] sm:$0x1]
        %v433 = vpack.c.bf16 %v413, %v413
        %v435 = vlaneseq
        %v436 = vshrl.u32 %v435, 7
        %v437 = vsub.s32 0, %v436
        %v438 = vrot.slane %v430, %v437
        %v456 = vunpack.c.l.b16 %v414
        %v457 = vunpack.c.l.b16 %v415
        %v458 = vunpack.c.l.b16 %v416
        %v459 = vunpack.c.l.b16 %v417
        %v460 = vunpack.c.l.b16 %v418
        %v461 = vunpack.c.l.b16 %v419
        %v462 = vunpack.c.l.b16 %v420
        %v463 = vunpack.c.l.b16 %v421
        %v464 = vunpack.c.l.b16 %v422
        %v465 = vunpack.c.l.b16 %v423
        %v466 = vunpack.c.l.b16 %v424
        %v467 = vunpack.c.l.b16 %v425
        %v468 = vunpack.c.l.b16 %v426
        %v469 = vunpack.c.l.b16 %v427
        %v470 = vunpack.c.l.b16 %v428
        %v471 = vunpack.c.l.b16 %v429
        %v472 = vpack.c.b16 %v457, %v456
        %v473 = vpack.c.b16 %v459, %v458
        %v474 = vpack.c.b16 %v461, %v460
        %v475 = vpack.c.b16 %v463, %v462
        %v476 = vpack.c.b16 %v465, %v464
        %v477 = vpack.c.b16 %v467, %v466
        %v478 = vpack.c.b16 %v469, %v468
        %v479 = vpack.c.b16 %v471, %v470
        %488 = vmatprep.subr.bf16.mxu0 0
        %489 = vmatpush1.bf16.msra.mxu0 %v472
        %490 = vmatprep.subr.bf16.mxu0 0
        %491 = vmatpush1.bf16.msra.mxu0 %v473
        %492 = vmatprep.subr.bf16.mxu0 0
        %493 = vmatpush1.bf16.msra.mxu0 %v474
        %494 = vmatprep.subr.bf16.mxu0 0
        %495 = vmatpush1.bf16.msra.mxu0 %v475
        %496 = vmatprep.subr.bf16.mxu0 0
        %497 = vmatpush1.bf16.msra.mxu0 %v476
        %498 = vmatprep.subr.bf16.mxu0 0
        %499 = vmatpush1.bf16.msra.mxu0 %v477
        %500 = vmatprep.subr.bf16.mxu0 0
        %501 = vmatpush1.bf16.msra.mxu0 %v478
        %502 = vmatprep.subr.bf16.mxu0 0
        %503 = vmatpush1.bf16.msra.mxu0 %v479
        %504 = vmatprep.subr.bf16.mxu0 0
        %505 = vmatpush1.bf16.msra.mxu0 0
        %506 = vmatprep.subr.bf16.mxu0 0
        %507 = vmatpush1.bf16.msra.mxu0 0
        %508 = vmatprep.subr.bf16.mxu0 0
        %509 = vmatpush1.bf16.msra.mxu0 0
        %510 = vmatprep.subr.bf16.mxu0 0
        %511 = vmatpush1.bf16.msra.mxu0 0
        %512 = vmatprep.subr.bf16.mxu0 0
        %513 = vmatpush1.bf16.msra.mxu0 0
        %514 = vmatprep.subr.bf16.mxu0 0
        %515 = vmatpush1.bf16.msra.mxu0 0
        %516 = vmatprep.subr.bf16.mxu0 0
        %517 = vmatpush1.bf16.msra.mxu0 0
        %518 = vmatprep.subr.bf16.mxu0 0
        %519 = vmatpush1.bf16.msra.mxu0 0
        %520 = vmatprep.mubr.bf16.mxu0 0
        %521 = vmatmul.mubr.bf16.gmra.mrb[0].mxu0 %v433
        %v522 = vpop.f32.mrb[0].mxu0
        %v523 = vadd.f32 %v438, %v522
        %v524 = vpop.f32.mrb[0].mxu0
        %v525 = vpop.f32.mrb[0].mxu0
        %v526 = vpop.f32.mrb[0].mxu0
        %527 = vdwg.mxu0
        %v528 = vtanh.pop %v523
        %529 = vadd.xlane.f32.xlu0 %v528
        %v530 = vpop.xlane.xlu0 %529
        %v531 = vmul.f32 %v530, 0.020833334
        %v532 = vmul.f32 %v528, %v528
        %533 = vadd.xlane.f32.xlu0 %v532
        %v534 = vpop.xlane.xlu0 %533
        %v535 = vmul.f32 %v534, 0.020833334
        %v536 = vmul.f32 %v531, %v531
        %v537 = vsub.f32 %v535, %v536
        %v538 = vsub.f32 %v528, %v531
        %v539 = vadd.f32 %v537, 1e-05
        %v540 = vrsqrt.pop %v539
        %v541 = vmul.f32 %v538, %v540
        %v543 = vlaneseq
        %v544 = vshrl.u32 %v543, 7
        %v545 = vsub.s32 0, %v544
        %v546 = vrot.slane %v431, %v545
        %v548 = vmul.f32 %v541, %v546
        %v550 = vlaneseq
        %v551 = vshrl.u32 %v550, 7
        %v552 = vsub.s32 0, %v551
        %v553 = vrot.slane %v432, %v552
        %v555 = vadd.f32 %v548, %v553
        %v556 = vld [vmem:[#allocation2] sm:$0xf]
        %v557 = vld [vmem:[#allocation2 + $0x4] sm:$0xf]
        %v558 = vld [vmem:[#allocation2 + $0x8] sm:$0xf]
        %v559 = vld [vmem:[#allocation2 + $0xc] sm:$0xf]
        %v560 = vld [vmem:[#allocation2 + $0x10] sm:$0xf]
        %v561 = vld [vmem:[#allocation2 + $0x14] sm:$0xf]
        %v562 = vld [vmem:[#allocation2 + $0x18] sm:$0xf]
        %v563 = vld [vmem:[#allocation2 + $0x1c] sm:$0xf]
        %v564 = vld [vmem:[#allocation2 + $0x20] sm:$0xf]
        %v565 = vld [vmem:[#allocation2 + $0x24] sm:$0xf]
        %v566 = vld [vmem:[#allocation2 + $0x28] sm:$0xf]
        %v567 = vld [vmem:[#allocation2 + $0x2c] sm:$0xf]
        %v568 = vld [vmem:[#allocation2 + $0x30] sm:$0xf]
        %v569 = vld [vmem:[#allocation2 + $0x34] sm:$0xf]
        %v570 = vld [vmem:[#allocation2 + $0x38] sm:$0xf]
        %v571 = vld [vmem:[#allocation2 + $0x3c] sm:$0xf]
        %v572 = vld [vmem:[%s6] sm:$0x1]
        %v573 = vld [vmem:[%s7] sm:$0x1]
        %v574 = vld [vmem:[%s8] sm:$0x1]
        %v575 = vpack.c.bf16 %v555, %v555
        %v577 = vlaneseq
        %v578 = vshrl.u32 %v577, 7
        %v579 = vsub.s32 0, %v578
        %v580 = vrot.slane %v572, %v579
        %v598 = vunpack.c.l.b16 %v556
        %v599 = vunpack.c.l.b16 %v557
        %v600 = vunpack.c.l.b16 %v558
        %v601 = vunpack.c.l.b16 %v559
        %v602 = vunpack.c.l.b16 %v560
        %v603 = vunpack.c.l.b16 %v561
        %v604 = vunpack.c.l.b16 %v562
        %v605 = vunpack.c.l.b16 %v563
        %v606 = vunpack.c.l.b16 %v564
        %v607 = vunpack.c.l.b16 %v565
        %v608 = vunpack.c.l.b16 %v566
        %v609 = vunpack.c.l.b16 %v567
        %v610 = vunpack.c.l.b16 %v568
        %v611 = vunpack.c.l.b16 %v569
        %v612 = vunpack.c.l.b16 %v570
        %v613 = vunpack.c.l.b16 %v571
        %v614 = vpack.c.b16 %v599, %v598
        %v615 = vpack.c.b16 %v601, %v600
        %v616 = vpack.c.b16 %v603, %v602
        %v617 = vpack.c.b16 %v605, %v604
        %v618 = vpack.c.b16 %v607, %v606
        %v619 = vpack.c.b16 %v609, %v608
        %v620 = vpack.c.b16 %v611, %v610
        %v621 = vpack.c.b16 %v613, %v612
        %630 = vmatprep.subr.bf16.mxu0 0
        %631 = vmatpush1.bf16.msra.mxu0 %v614
        %632 = vmatprep.subr.bf16.mxu0 0
        %633 = vmatpush1.bf16.msra.mxu0 %v615
        %634 = vmatprep.subr.bf16.mxu0 0
        %635 = vmatpush1.bf16.msra.mxu0 %v616
        %636 = vmatprep.subr.bf16.mxu0 0
        %637 = vmatpush1.bf16.msra.mxu0 %v617
        %638 = vmatprep.subr.bf16.mxu0 0
        %639 = vmatpush1.bf16.msra.mxu0 %v618
        %640 = vmatprep.subr.bf16.mxu0 0
        %641 = vmatpush1.bf16.msra.mxu0 %v619
        %642 = vmatprep.subr.bf16.mxu0 0
        %643 = vmatpush1.bf16.msra.mxu0 %v620
        %644 = vmatprep.subr.bf16.mxu0 0
        %645 = vmatpush1.bf16.msra.mxu0 %v621
        %646 = vmatprep.subr.bf16.mxu0 0
        %647 = vmatpush1.bf16.msra.mxu0 0
        %648 = vmatprep.subr.bf16.mxu0 0
        %649 = vmatpush1.bf16.msra.mxu0 0
        %650 = vmatprep.subr.bf16.mxu0 0
        %651 = vmatpush1.bf16.msra.mxu0 0
        %652 = vmatprep.subr.bf16.mxu0 0
        %653 = vmatpush1.bf16.msra.mxu0 0
        %654 = vmatprep.subr.bf16.mxu0 0
        %655 = vmatpush1.bf16.msra.mxu0 0
        %656 = vmatprep.subr.bf16.mxu0 0
        %657 = vmatpush1.bf16.msra.mxu0 0
        %658 = vmatprep.subr.bf16.mxu0 0
        %659 = vmatpush1.bf16.msra.mxu0 0
        %660 = vmatprep.subr.bf16.mxu0 0
        %661 = vmatpush1.bf16.msra.mxu0 0
        %662 = vmatprep.mubr.bf16.mxu0 0
        %663 = vmatmul.mubr.bf16.gmra.mrb[0].mxu0 %v575
        %v664 = vpop.f32.mrb[0].mxu0
        %v665 = vadd.f32 %v580, %v664
        %v666 = vpop.f32.mrb[0].mxu0
        %v667 = vpop.f32.mrb[0].mxu0
        %v668 = vpop.f32.mrb[0].mxu0
        %669 = vdwg.mxu0
        %v670 = vtanh.pop %v665
        %671 = vadd.xlane.f32.xlu0 %v670
        %v672 = vpop.xlane.xlu0 %671
        %v673 = vmul.f32 %v672, 0.03125
        %v674 = vmul.f32 %v670, %v670
        %675 = vadd.xlane.f32.xlu0 %v674
        %v676 = vpop.xlane.xlu0 %675
        %v677 = vmul.f32 %v676, 0.03125
        %v678 = vmul.f32 %v673, %v673
        %v679 = vsub.f32 %v677, %v678
        %v680 = vsub.f32 %v670, %v673
        %v681 = vadd.f32 %v679, 1e-05
        %v682 = vrsqrt.pop %v681
        %v683 = vmul.f32 %v680, %v682
        %v685 = vlaneseq
        %v686 = vshrl.u32 %v685, 7
        %v687 = vsub.s32 0, %v686
        %v688 = vrot.slane %v573, %v687
        %v690 = vmul.f32 %v683, %v688
        %v692 = vlaneseq
        %v693 = vshrl.u32 %v692, 7
        %v694 = vsub.s32 0, %v693
        %v695 = vrot.slane %v574, %v694
        %v697 = vadd.f32 %v690, %v695
        %v698 = vld [vmem:[#allocation4] sm:$0xf]
        %v699 = vld [vmem:[#allocation4 + $0x4] sm:$0xf]
        %v700 = vld [vmem:[#allocation4 + $0x8] sm:$0xf]
        %v701 = vld [vmem:[#allocation4 + $0xc] sm:$0xf]
        %v702 = vld [vmem:[#allocation4 + $0x10] sm:$0xf]
        %v703 = vld [vmem:[#allocation4 + $0x14] sm:$0xf]
        %v704 = vld [vmem:[#allocation4 + $0x18] sm:$0xf]
        %v705 = vld [vmem:[#allocation4 + $0x1c] sm:$0xf]
        %v706 = vld [vmem:[#allocation4 + $0x20] sm:$0xf]
        %v707 = vld [vmem:[#allocation4 + $0x24] sm:$0xf]
        %v708 = vld [vmem:[#allocation4 + $0x28] sm:$0xf]
        %v709 = vld [vmem:[#allocation4 + $0x2c] sm:$0xf]
        %v710 = vld [vmem:[#allocation4 + $0x30] sm:$0xf]
        %v711 = vld [vmem:[#allocation4 + $0x34] sm:$0xf]
        %v712 = vld [vmem:[#allocation4 + $0x38] sm:$0xf]
        %v713 = vld [vmem:[#allocation4 + $0x3c] sm:$0xf]
        %v714 = vld [vmem:[%s10] sm:$0x1]
        %v715 = vpack.c.bf16 %v697, %v697
        %v717 = vlaneseq
        %v718 = vshrl.u32 %v717, 7
        %v719 = vsub.s32 0, %v718
        %v720 = vrot.slane %v714, %v719
        %v738 = vunpack.c.l.b16 %v698
        %v739 = vunpack.c.l.b16 %v699
        %v740 = vunpack.c.l.b16 %v700
        %v741 = vunpack.c.l.b16 %v701
        %v742 = vunpack.c.l.b16 %v702
        %v743 = vunpack.c.l.b16 %v703
        %v744 = vunpack.c.l.b16 %v704
        %v745 = vunpack.c.l.b16 %v705
        %v746 = vunpack.c.l.b16 %v706
        %v747 = vunpack.c.l.b16 %v707
        %v748 = vunpack.c.l.b16 %v708
        %v749 = vunpack.c.l.b16 %v709
        %v750 = vunpack.c.l.b16 %v710
        %v751 = vunpack.c.l.b16 %v711
        %v752 = vunpack.c.l.b16 %v712
        %v753 = vunpack.c.l.b16 %v713
        %v754 = vpack.c.b16 %v739, %v738
        %v755 = vpack.c.b16 %v741, %v740
        %v756 = vpack.c.b16 %v743, %v742
        %v757 = vpack.c.b16 %v745, %v744
        %v758 = vpack.c.b16 %v747, %v746
        %v759 = vpack.c.b16 %v749, %v748
        %v760 = vpack.c.b16 %v751, %v750
        %v761 = vpack.c.b16 %v753, %v752
        %770 = vmatprep.subr.bf16.mxu0 0
        %771 = vmatpush1.bf16.msra.mxu0 %v754
        %772 = vmatprep.subr.bf16.mxu0 0
        %773 = vmatpush1.bf16.msra.mxu0 %v755
        %774 = vmatprep.subr.bf16.mxu0 0
        %775 = vmatpush1.bf16.msra.mxu0 %v756
        %776 = vmatprep.subr.bf16.mxu0 0
        %777 = vmatpush1.bf16.msra.mxu0 %v757
        %778 = vmatprep.subr.bf16.mxu0 0
        %779 = vmatpush1.bf16.msra.mxu0 %v758
        %780 = vmatprep.subr.bf16.mxu0 0
        %781 = vmatpush1.bf16.msra.mxu0 %v759
        %782 = vmatprep.subr.bf16.mxu0 0
        %783 = vmatpush1.bf16.msra.mxu0 %v760
        %784 = vmatprep.subr.bf16.mxu0 0
        %785 = vmatpush1.bf16.msra.mxu0 %v761
        %786 = vmatprep.subr.bf16.mxu0 0
        %787 = vmatpush1.bf16.msra.mxu0 0
        %788 = vmatprep.subr.bf16.mxu0 0
        %789 = vmatpush1.bf16.msra.mxu0 0
        %790 = vmatprep.subr.bf16.mxu0 0
        %791 = vmatpush1.bf16.msra.mxu0 0
        %792 = vmatprep.subr.bf16.mxu0 0
        %793 = vmatpush1.bf16.msra.mxu0 0
        %794 = vmatprep.subr.bf16.mxu0 0
        %795 = vmatpush1.bf16.msra.mxu0 0
        %796 = vmatprep.subr.bf16.mxu0 0
        %797 = vmatpush1.bf16.msra.mxu0 0
        %798 = vmatprep.subr.bf16.mxu0 0
        %799 = vmatpush1.bf16.msra.mxu0 0
        %800 = vmatprep.subr.bf16.mxu0 0
        %801 = vmatpush1.bf16.msra.mxu0 0
        %802 = vmatprep.mubr.bf16.mxu0 0
        %803 = vmatmul.mubr.bf16.gmra.mrb[0].mxu0 %v715
        %v804 = vpop.f32.mrb[0].mxu0
        %v805 = vadd.f32 %v720, %v804
        %v806 = vpop.f32.mrb[0].mxu0
        %v807 = vpop.f32.mrb[0].mxu0
        %v808 = vpop.f32.mrb[0].mxu0
        %809 = vdwg.mxu0
        %v810 = vxor.u32 %v805, 2147483648
        %v811 = vmul.f32 %v810, 1.442695
        %v812 = vpow.pop %v811
        %v813 = vadd.f32 %v812, 1.0
        %v814 = vrcp.pop %v813
        %v815 = vmul.f32 1.0, %v814
        %816 = vst [vmem:[%s411] sm:$0xff] %v815
        %p817 = scmp.lt.s32.totalorder %s24, 1
        %s818 = scalar_select %p817, %s24, 1
        %s819 = smul.addr %s818, 8
        %s820 = scalar_lea.vmem %s11, %s819
        // Predicated region
        $region73: #{_forward_impl.1} parent=63 // pred_check
          %p821 = pneg %p278
        $region74: #{_forward_impl.1} parent=63 // pred_check_branch
          %823 = sbr.rel (%p821) target = $region76
        $region75: #{_forward_impl.1} parent=63 // pred_region
          _
        $region76: #{_forward_impl.1} parent=63 // pred_fallthru
          _
      $region64: #{_forward_impl.1} parent=5 // pred_fallthru
        _
      %p824 = scmp.le.s32.totalorder 2, %s19
      // Predicated region
      $region77: #{_forward_impl.1} parent=5 // pred_check
        %p825 = pneg %p824
      $region78: #{_forward_impl.1} parent=5 // pred_check_branch
        %827 = sbr.rel (%p825) target = $region80
      $region79: #{_forward_impl.1} parent=5 // pred_region
        %s828 = ssub.s32 %s19, 2
        // Predicated region
        $region81: #{_forward_impl.1} parent=79 // pred_check
          %p829 = pneg %p284
        $region82: #{_forward_impl.1} parent=79 // pred_check_branch
          %831 = sbr.rel (%p829) target = $region84
        $region83: #{_forward_impl.1} parent=79 // pred_region
          %p832 = scmp.lt.s32.totalorder %s25, 1
          %s833 = scalar_select %p832, %s25, 1
          %s834 = smul.addr %s833, 8
          %s835 = scalar_lea.vmem %s11, %s834
        $region84: #{_forward_impl.1} parent=79 // pred_fallthru
          _
      $region80: #{_forward_impl.1} parent=5 // pred_fallthru
        _
    $region6: #{_forward_impl.1} parent=1 // loop_footer
      %s23 = sadd.s32 1, %s19
    $region7: #{_forward_impl.1} parent=1 // loop_footer_branch
      %18 = sbr.rel target = $region3
    $region8: #{_forward_impl.1} parent=1 // loop_exit
      _
    %836 = vsyncpa [#allocation3], 1
    %s837 = scalar_lea.sflag [#allocation3], 1
    %838 = vsyncpa %s837, 1
    %839 = vsyncpa [#allocation5], 1

</llo_original>
